<compile_context>
chip_gen: v7x
topology: tpu7x:2x2x1
jax: 0.10.0
libtpu: 0.0.40
codegen_flags: <defaults>
</compile_context>

<pallas_src>
import functools

import jax
import jax.numpy as jnp
from jax import lax
from jax.experimental import pallas as pl
from jax.experimental.pallas import tpu as pltpu


# ---------------------------------------------------------------------------
# Hardware-aware knobs
# ---------------------------------------------------------------------------

def _vmem_capacity_bytes() -> int:
    try:
        return int(pltpu.get_tpu_info().vmem_capacity_bytes)
    except Exception:
        return 64 * 1024 * 1024  # conservative fallback: v7x-class (64 MiB / TC)


def _pick_tile(n_pad: int, cap: int) -> int:
    """Largest tile in {512, 256, 128} that divides n_pad and is <= cap."""
    for t in (512, 256, 128):
        if t <= cap and n_pad % t == 0:
            return t
    return min(n_pad, 128)  # n_pad is always a multiple of 128


# ---------------------------------------------------------------------------
# Stage 1: fused QKV projection (1x1 conv, no bias) -> (b, 3*hidden, n_pad)
# ---------------------------------------------------------------------------

def _qkv_proj_kernel(x_ref, w_ref, o_ref):
    # x_ref: (c, tn)   w_ref: (3*hidden, c)   o_ref: (3*hidden, tn)
    o_ref[...] = jnp.dot(
        w_ref[...], x_ref[...],
        preferred_element_type=jnp.float32).astype(o_ref.dtype)


def _qkv_projection(x_flat, w_qkv, vmem_limit):
    b, c, n_pad = x_flat.shape
    out_ch = w_qkv.shape[0]
    tn = _pick_tile(n_pad, 512)
    return pl.pallas_call(
        _qkv_proj_kernel,
        out_shape=jax.ShapeDtypeStruct((b, out_ch, n_pad), x_flat.dtype),
        grid_spec=pltpu.PrefetchScalarGridSpec(
            num_scalar_prefetch=0,
            grid=(b, n_pad // tn),
            in_specs=[
                pl.BlockSpec((None, c, tn), lambda bi, ni: (bi, 0, ni)),
                pl.BlockSpec((out_ch, c), lambda bi, ni: (0, 0)),
            ],
            out_specs=pl.BlockSpec((None, out_ch, tn), lambda bi, ni: (bi, 0, ni)),
        ),
        compiler_params=pltpu.CompilerParams(
            dimension_semantics=("parallel", "parallel"),
            vmem_limit_bytes=vmem_limit,
        ),
    )(x_flat, w_qkv)


# ---------------------------------------------------------------------------
# Stage 2: flash-style attention + fused output projection
# ---------------------------------------------------------------------------

def _flash_attn_kernel(scale, heads, dim_head, n_valid, n_pad,
                       q_ref, k_ref, v_ref, wout_ref, b_ref, o_ref,
                       acc_ref, m_ref, l_ref):
    # q_ref   : (hidden, tq)   query band of the current q tile (batch squeezed)
    # k_ref   : (hidden, tk)   key band of the current kv tile
    # v_ref   : (hidden, tk)   value band of the current kv tile
    # wout_ref: (c, hidden)    output projection weight (grid-constant, resident)
    # b_ref   : (c, 1)         output projection bias (f32)
    # o_ref   : (c, tq)        output tile (written at the last kv step)
    # acc_ref : (hidden, tq)   f32 per-head output accumulator (heads stacked)
    # m_ref   : (heads, 1, tq) f32 running max per head
    # l_ref   : (heads, 1, tq) f32 running denominator per head
    ki = pl.program_id(2)
    nk = pl.num_programs(2)
    tq = q_ref.shape[1]
    tk = k_ref.shape[1]

    @pl.when(ki == 0)
    def _():
        acc_ref[...] = jnp.zeros(acc_ref.shape, acc_ref.dtype)
        m_ref[...] = jnp.full(m_ref.shape, -jnp.inf, m_ref.dtype)
        l_ref[...] = jnp.zeros(l_ref.shape, l_ref.dtype)

    # Mask zero-padded key columns (only possible in the last kv tile; applied
    # unconditionally since it's a single cheap VPU select, and skipped
    # entirely at trace time when n is already lane-aligned).
    if n_pad != n_valid:
        key_idx = ki * tk + lax.broadcasted_iota(jnp.int32, (tk, tq), 0)
        key_valid = key_idx < n_valid
    else:
        key_valid = None

    for h in range(heads):                      # static unroll; heads is small
        h0 = h * dim_head
        q = q_ref[pl.ds(h0, dim_head), :]       # (d, tq)
        k = k_ref[pl.ds(h0, dim_head), :]       # (d, tk)
        v = v_ref[pl.ds(h0, dim_head), :]       # (d, tk)

        # sim[j, i] = scale * <k[:, j], q[:, i]>  -> (tk, tq), f32 accumulation.
        # Keys sit on the sublane axis so softmax reductions are sublane
        # reductions; queries stay on the lane axis through to the output.
        sim = lax.dot_general(k, q, (((0,), (0,)), ((), ())),
                              preferred_element_type=jnp.float32) * scale
        if key_valid is not None:
            sim = jnp.where(key_valid, sim, -1e30)

        m_prev = m_ref[h]                                       # (1, tq)
        l_prev = l_ref[h]                                       # (1, tq)
        m_new = jnp.maximum(m_prev, jnp.max(sim, axis=0, keepdims=True))
        alpha = jnp.exp(m_prev - m_new)                         # (1, tq)
        # TODO(synk): on v6e/v7x a bf16 exp would relieve the binding EUP slot
        # (dim_head=32 makes this kernel EUP-bound); kept f32 so the same
        # kernel is safe on v5e, whose VPU/EUP have no bf16 path.
        p = jnp.exp(sim - m_new)                                # (tk, tq), f32
        l_ref[h] = alpha * l_prev + jnp.sum(p, axis=0, keepdims=True)
        m_ref[h] = m_new

        # acc_h <- alpha * acc_h + v @ p          -> (d, tq), f32 accumulation
        acc_h = acc_ref[pl.ds(h0, dim_head), :]
        pv = jnp.dot(v, p.astype(v.dtype), preferred_element_type=jnp.float32)
        acc_ref[pl.ds(h0, dim_head), :] = alpha * acc_h + pv

    @pl.when(ki == nk - 1)
    def _():
        # Normalize each head (EUP approx reciprocal), then one fused
        # K=hidden output projection + bias -> lane-dense (c, tq) store.
        for h in range(heads):
            h0 = h * dim_head
            inv = pl.reciprocal(l_ref[h], approx=True)          # (1, tq)
            acc_ref[pl.ds(h0, dim_head), :] = acc_ref[pl.ds(h0, dim_head), :] * inv
        out_hidden = acc_ref[...].astype(wout_ref.dtype)        # (hidden, tq)
        y = jnp.dot(wout_ref[...], out_hidden,
                    preferred_element_type=jnp.float32)         # (c, tq)
        o_ref[...] = (y + b_ref[...].astype(jnp.float32)).astype(o_ref.dtype)


# ---------------------------------------------------------------------------
# Wrapper
# ---------------------------------------------------------------------------

def attention_forward(x, w_qkv, w_out, b_out, heads, dim_head,
                      compute_dtype=None):
    """Multi-head self-attention over a 2D feature map (PyTorch `Attention`).

    x     : (b, c, h, w)                  NCHW input
    w_qkv : (3 * heads * dim_head, c)     squeezed 1x1-conv weight of to_qkv
    w_out : (c, heads * dim_head)         squeezed 1x1-conv weight of to_out
    b_out : (c,)                          bias of to_out
    compute_dtype : optional MXU operand dtype (e.g. jnp.bfloat16); f32
        accumulation and f32 softmax math are kept regardless.
    """
    b, c, h, w = x.shape
    n = h * w
    hidden = heads * dim_head
    scale = float(dim_head) ** (-0.5)
    out_dtype = x.dtype
    cdt = jnp.dtype(compute_dtype) if compute_dtype is not None else jnp.dtype(x.dtype)

    # Generation-aware budgets: <=48 MiB (v7x, 64 MiB/TC) up to ~96 MiB (v5e/v6e).
    vmem_cap = _vmem_capacity_bytes()
    vmem_limit = int(min(100 * 1024 * 1024, (vmem_cap * 3) // 4))

    # Pad the flattened spatial axis to a lane multiple -> lane-dense stores and
    # un-masked vector ops; padded key columns are masked inside the kernel.
    n_pad = ((n + 127) // 128) * 128
    x_flat = x.reshape(b, c, n).astype(cdt)
    if n_pad != n:
        x_flat = jnp.pad(x_flat, ((0, 0), (0, 0), (0, n_pad - n)))

    w_qkv = w_qkv.astype(cdt)
    w_out = w_out.astype(cdt)
    bias = b_out.reshape(c, 1).astype(jnp.float32)

    # Stage 1: fused QKV projection (hoisted out of the attention kernel).
    qkv = _qkv_projection(x_flat, w_qkv, vmem_limit)       # (b, 3*hidden, n_pad)

    # Stage 2: flash attention.  Bigger q tiles on v5e/v6e (128 MiB VMEM).
    tq = _pick_tile(n_pad, 512 if vmem_cap >= 96 * 1024 * 1024 else 256)
    tk = _pick_tile(n_pad, 512)
    n_qt = n_pad // tq
    n_kt = n_pad // tk

    kernel = functools.partial(_flash_attn_kernel, scale, heads, dim_head, n, n_pad)

    itemsize = jnp.dtype(cdt).itemsize
    cost = pl.CostEstimate(
        flops=int(4 * b * heads * n_pad * n_pad * dim_head      # QK^T + PV
                  + 2 * b * n_pad * hidden * c),                # output projection
        transcendentals=int(b * heads * n_pad * n_pad),
        bytes_accessed=int(itemsize * (b * hidden * n_pad            # q (once/q-tile)
                                       + 2 * b * hidden * n_pad * n_qt  # k/v streamed
                                       + w_out.size)
                           + 4 * (b * c * n_pad + c)))

    y_flat = pl.pallas_call(
        kernel,
        out_shape=jax.ShapeDtypeStruct((b, c, n_pad), out_dtype),
        grid_spec=pltpu.PrefetchScalarGridSpec(
            num_scalar_prefetch=0,
            grid=(b, n_qt, n_kt),
            in_specs=[
                # q / k / v are row-bands (block index 0/1/2 along dim 1) of the
                # same (b, 3*hidden, n_pad) array.
                pl.BlockSpec((None, hidden, tq), lambda bi, qi, ki: (bi, 0, qi)),
                pl.BlockSpec((None, hidden, tk), lambda bi, qi, ki: (bi, 1, ki)),
                pl.BlockSpec((None, hidden, tk), lambda bi, qi, ki: (bi, 2, ki)),
                # Output-projection weight & bias: grid-constant, VMEM-resident.
                pl.BlockSpec((c, hidden), lambda bi, qi, ki: (0, 0)),
                pl.BlockSpec((c, 1), lambda bi, qi, ki: (0, 0)),
            ],
            out_specs=pl.BlockSpec((None, c, tq), lambda bi, qi, ki: (bi, 0, qi)),
            scratch_shapes=[
                pltpu.VMEM((hidden, tq), jnp.float32),      # per-head output accum
                pltpu.VMEM((heads, 1, tq), jnp.float32),    # running max
                pltpu.VMEM((heads, 1, tq), jnp.float32),    # running denominator
            ],
        ),
        compiler_params=pltpu.CompilerParams(
            # QKV is precomputed, so batch AND q-tile axes are independent
            # (v7x megacore can split either); the kv axis carries m/l/acc.
            dimension_semantics=("parallel", "parallel", "arbitrary"),
            vmem_limit_bytes=vmem_limit,
        ),
        cost_estimate=cost,
    )(qkv, qkv, qkv, w_out, bias)

    if n_pad != n:
        y_flat = y_flat[:, :, :n]
    return y_flat.reshape(b, c, h, w)


# ---------------------------------------------------------------------------
# Pure-JAX reference mirroring the PyTorch forward exactly
# ---------------------------------------------------------------------------

def attention_reference(x, w_qkv, w_out, b_out, heads, dim_head):
    b, c, h, w = x.shape
    n = h * w
    hidden = heads * dim_head
    scale = dim_head ** (-0.5)

    x_flat = x.reshape(b, c, n)                                # (b, c, n)
    qkv = jnp.einsum('oc,bcn->bon', w_qkv, x_flat)             # 1x1 conv, no bias
    q, k, v = jnp.split(qkv, 3, axis=1)                        # each (b, hidden, n)
    reshape_heads = lambda t: t.reshape(b, heads, dim_head, n)
    q, k, v = map(reshape_heads, (q, k, v))
    q = q * scale
    sim = jnp.einsum('bhdi,bhdj->bhij', q, k)
    sim = sim - jnp.max(sim, axis=-1, keepdims=True)
    attn = jax.nn.softmax(sim, axis=-1)
    out = jnp.einsum('bhij,bhdj->bhid', attn, v)               # (b, heads, n, d)
    out = jnp.transpose(out, (0, 1, 3, 2)).reshape(b, hidden, n)
    y = jnp.einsum('oc,bcn->bon', w_out, out) + b_out[None, :, None]
    return y.reshape(b, c, h, w)


if __name__ == "__main__":
    HEADS, DIM_HEAD = 4, 32
    HIDDEN = HEADS * DIM_HEAD
    B, DIM = 2, 32

    key = jax.random.PRNGKey(0)
    kx, kqkv, kwo, kbo, kx2 = jax.random.split(key, 5)

    w_qkv = jax.random.normal(kqkv, (3 * HIDDEN, DIM), dtype=jnp.float32) * 0.05
    w_out = jax.random.normal(kwo, (DIM, HIDDEN), dtype=jnp.float32) * 0.05
    b_out = jax.random.normal(kbo, (DIM,), dtype=jnp.float32) * 0.05

    # Case 1: 16x16 feature map (n=256, already lane-aligned), f32 compute.
    x1 = jax.random.normal(kx, (B, DIM, 16, 16), dtype=jnp.float32)
    y1 = jax.block_until_ready(
        attention_forward(x1, w_qkv, w_out, b_out, HEADS, DIM_HEAD))
    y1_ref = attention_reference(x1, w_qkv, w_out, b_out, HEADS, DIM_HEAD)
    assert y1.shape == x1.shape
    assert jnp.allclose(y1, y1_ref, atol=2e-3, rtol=2e-3), "f32 16x16 mismatch"

    # Case 2: 14x14 feature map (n=196 -> padded to 256, masked keys), f32.
    x2 = jax.random.normal(kx2, (B, DIM, 14, 14), dtype=jnp.float32)
    y2 = jax.block_until_ready(
        attention_forward(x2, w_qkv, w_out, b_out, HEADS, DIM_HEAD))
    y2_ref = attention_reference(x2, w_qkv, w_out, b_out, HEADS, DIM_HEAD)
    assert jnp.allclose(y2, y2_ref, atol=2e-3, rtol=2e-3), "f32 padded-n mismatch"

    # Case 3: bf16 MXU operands (f32 accumulation + f32 softmax) vs f32 reference.
    y3 = jax.block_until_ready(
        attention_forward(x1, w_qkv, w_out, b_out, HEADS, DIM_HEAD,
                          compute_dtype=jnp.bfloat16))
    assert jnp.allclose(y3, y1_ref, atol=2.5e-2, rtol=2.5e-2), "bf16 compute mismatch"

    print("KERNEL_OK")
</pallas_src>

<mosaic_0001>
module attributes {stable_mosaic.version = 11 : i64} {
  func.func @_qkv_proj_kernel(%arg0: i32, %arg1: i32, %arg2: memref<1x32x256xf32, #tpu.memory_space<vmem>>, %arg3: memref<384x32xf32, #tpu.memory_space<vmem>>, %arg4: memref<1x384x256xf32, #tpu.memory_space<vmem>>) attributes {dimension_semantics = [#tpu.dimension_semantics<parallel>, #tpu.dimension_semantics<parallel>], iteration_bounds = array<i64: 2, 1>, scalar_prefetch = 0 : i64, scratch_operands = 0 : i64, tpu.core_type = #tpu.core_type<tc>, window_params = [{transform_indices = @transform_0, window_bounds = array<i64: 1, 32, 256>}, {pipeline_mode = #tpu.pipeline_mode<synchronous>, transform_indices = @transform_1, window_bounds = array<i64: 384, 32>}, {transform_indices = @transform_2, window_bounds = array<i64: 1, 384, 256>}]} {
    %c0 = arith.constant 0 : index
    %c0_0 = arith.constant 0 : index
    %0 = vector.load %arg3[%c0, %c0_0] : memref<384x32xf32, #tpu.memory_space<vmem>>, vector<384x32xf32>
    %c0_1 = arith.constant 0 : index
    %c0_2 = arith.constant 0 : index
    %c0_3 = arith.constant 0 : index
    %1 = vector.load %arg2[%c0_1, %c0_2, %c0_3] : memref<1x32x256xf32, #tpu.memory_space<vmem>>, vector<1x32x256xf32>
    %2 = vector.shape_cast %1 : vector<1x32x256xf32> to vector<32x256xf32>
    %cst = arith.constant dense<0.000000e+00> : vector<384x256xf32>
    %3 = tpu.matmul %0, %2, %cst {dimension_numbers = #tpu.dot_dimension_numbers<[1], [0], [0], [1], [0, 0, 1, 1], [], []>} : vector<384x32xf32>, vector<32x256xf32>, vector<384x256xf32> -> vector<384x256xf32>
    %c0_4 = arith.constant 0 : index
    %c0_5 = arith.constant 0 : index
    %c0_6 = arith.constant 0 : index
    %4 = vector.load %arg4[%c0_4, %c0_5, %c0_6] : memref<1x384x256xf32, #tpu.memory_space<vmem>>, vector<1x384x256xf32>
    %5 = vector.shape_cast %4 : vector<1x384x256xf32> to vector<384x256xf32>
    %6 = vector.shape_cast %3 : vector<384x256xf32> to vector<1x384x256xf32>
    tpu.vector_store %arg4[%c0_4, %c0_5, %c0_6], %6 {strides = array<i32>} : memref<1x384x256xf32, #tpu.memory_space<vmem>>, vector<1x384x256xf32>,
    return
  }
  func.func @transform_0(%arg0: i32, %arg1: i32) -> (i32, i32, i32) {
    %c0_i32 = arith.constant 0 : i32
    %c0_i32_0 = arith.constant 0 : i32
    return %arg0, %c0_i32, %arg1 : i32, i32, i32
  }
  func.func @transform_1(%arg0: i32, %arg1: i32) -> (i32, i32) {
    %c0_i32 = arith.constant 0 : i32
    %c0_i32_0 = arith.constant 0 : i32
    %c0_i32_1 = arith.constant 0 : i32
    return %c0_i32, %c0_i32_0 : i32, i32
  }
  func.func @transform_2(%arg0: i32, %arg1: i32) -> (i32, i32, i32) {
    %c0_i32 = arith.constant 0 : i32
    %c0_i32_0 = arith.constant 0 : i32
    return %arg0, %c0_i32, %arg1 : i32, i32, i32
  }
}

</mosaic_0001>

<llo_original>
// kernel: tpu_custom_call.1
$region0: #{tpu_custom_call.1}
  #allocation0 [shape = 'u32[]', space=smem, size = 0x4, offset = 0x4, fixed_abs, tag = 'smem constant byte address 0x4 - core index']
  #allocation1 [shape = 'u32[144,128]{1,0:T(1,128)}', space=vmem, size = 0x12000, scoped, tag = 'internal scratch']
  %s0 = inlined_call_operand.vmem [shape: f32[2,32,256], index: 0, kind: input, shape index: {}]
  %s1 = inlined_call_operand.vmem [shape: f32[384,32], index: 1, kind: input, shape index: {}]
  %s2 = inlined_call_operand.hbm [shape: f32[2,384,256], index: 2, kind: output, shape index: {}]
  %s3 = sld [smem:[#allocation0]]
  $region41: #{tpu_custom_call.1} parent=0
    _
  %s5 = ssub.s32 1, %s3
  %s6 = scalar_select 0, %s5, %s3
  $region1: #{tpu_custom_call.1} parent=0
    #allocation2 [shape = 'u8[786432]{0}', space=vmem, size = 0xc0000, scoped, tag = 'output window, operand 0']
    #allocation3 [shape = 's32[2]{0}', space=sflag, size = 0x8, scoped, tag = 'scoped memory for tpu_custom_call.1']
    %7 = vsyncpa [#allocation3], 0
    %s8 = scalar_lea.sflag [#allocation3], 1
    %9 = vsyncpa %s8, 0
    loop: start=0, step=1, limit=4
    $region2: #{tpu_custom_call.1} parent=1 // loop_pre_header
      _
    $region3: #{tpu_custom_call.1} parent=1 // loop_header
      %s11 = sphi 0, %s15
      %p12 = scmp.ge.s32.totalorder %s11, 4
      %s18 = sphi 0, %s30
      %s19 = sphi 0, %s26
      %s20 = sphi 0, %s18
      %s21 = sphi 0, %s19
      %s22 = sphi 0, %s20
      %s23 = sphi 0, %s21
      %s35 = sphi 0, %s37
      %s38 = sphi 0, %s35
      %s39 = sphi 0, %s38
      %s55 = sphi 0, %s39
      %s59 = sphi 0, %s59
      %s61 = sphi 0, %s59
      %s62 = sphi 0, %s61
      %s76 = sphi 0, %s62
      %s84 = sphi 0, %s86
      %s87 = sphi 0, %s84
      %s88 = sphi 0, %s87
      %s104 = sphi 0, %s88
    $region4: #{tpu_custom_call.1} parent=1 // loop_header_branch
      %14 = sbr.rel (%p12) target = $region8
    $region5: #{tpu_custom_call.1} parent=1 // loop_body
      %s16 = ssub.s32 %s11, 1
      %s17 = ssub.s32 %s11, 2
      %s24 = sadd.s32 1, %s19
      %p25 = scmp.ge.s32.totalorder %s24, 1
      %s26 = scalar_select %p25, 0, %s24
      %s27 = sadd.s32 1, %s18
      %s28 = scalar_select %p25, %s27, %s18
      %p29 = scmp.ge.s32.totalorder %s28, 2
      %s30 = scalar_select %p29, 0, %s28
      %s31 = ssub.s32 %s18, %s30
      %s32 = ssub.s32 %s19, %s26
      %s33 = sor.u32 %s31, %s32
      %p34 = scmp.eq.s32.totalorder %s33, 0
      %s36 = sadd.s32 %s35, 1
      %s37 = scalar_select %p34, %s35, %s36
      %p40 = pneg %p34
      %p41 = scmp.eq.s32.totalorder %s11, 1
      %p42 = por %p40, %p41
      %p43 = scmp.ne.s32.totalorder %s35, %s38
      %p44 = scmp.eq.s32.totalorder %s11, 0
      %p45 = por %p43, %p44
      %p46 = scmp.ne.s32.totalorder %s35, %s38
      %p47 = scmp.eq.s32.totalorder %s16, 1
      %p48 = por %p46, %p47
      %p49 = scmp.ne.s32.totalorder %s38, %s39
      %p50 = scmp.eq.s32.totalorder %s16, 0
      %p51 = por %p49, %p50
      %p52 = scmp.ne.s32.totalorder %s38, %s39
      %p53 = scmp.eq.s32.totalorder %s17, 1
      %p54 = por %p52, %p53
      %p56 = scmp.ne.s32.totalorder %s39, %s55
      %p57 = scmp.eq.s32.totalorder %s17, 0
      %p58 = por %p56, %p57
      %s60 = sadd.s32 %s59, 1
      %p63 = scmp.eq.s32.totalorder %s11, 1
      %p64 = scmp.ne.s32.totalorder %s59, %s61
      %p65 = scmp.eq.s32.totalorder %s11, 0
      %p66 = por %p64, %p65
      %p67 = scmp.ne.s32.totalorder %s59, %s61
      %p68 = scmp.eq.s32.totalorder %s16, 1
      %p69 = por %p67, %p68
      %p70 = scmp.ne.s32.totalorder %s61, %s62
      %p71 = scmp.eq.s32.totalorder %s16, 0
      %p72 = por %p70, %p71
      %p73 = scmp.ne.s32.totalorder %s61, %s62
      %p74 = scmp.eq.s32.totalorder %s17, 1
      %p75 = por %p73, %p74
      %p77 = scmp.ne.s32.totalorder %s62, %s76
      %p78 = scmp.eq.s32.totalorder %s17, 0
      %p79 = por %p77, %p78
      %s80 = ssub.s32 %s18, %s30
      %s81 = ssub.s32 %s19, %s26
      %s82 = sor.u32 %s80, %s81
      %p83 = scmp.eq.s32.totalorder %s82, 0
      %s85 = sadd.s32 %s84, 1
      %s86 = scalar_select %p83, %s84, %s85
      %p89 = pneg %p83
      %p90 = scmp.eq.s32.totalorder %s11, 1
      %p91 = por %p89, %p90
      %p92 = scmp.ne.s32.totalorder %s84, %s87
      %p93 = scmp.eq.s32.totalorder %s11, 0
      %p94 = por %p92, %p93
      %p95 = scmp.ne.s32.totalorder %s84, %s87
      %p96 = scmp.eq.s32.totalorder %s16, 1
      %p97 = por %p95, %p96
      %p98 = scmp.ne.s32.totalorder %s87, %s88
      %p99 = scmp.eq.s32.totalorder %s16, 0
      %p100 = por %p98, %p99
      %p101 = scmp.ne.s32.totalorder %s87, %s88
      %p102 = scmp.eq.s32.totalorder %s17, 1
      %p103 = por %p101, %p102
      %p105 = scmp.ne.s32.totalorder %s88, %s104
      %p106 = scmp.eq.s32.totalorder %s17, 0
      %p107 = por %p105, %p106
      %p108 = scmp.le.s32.totalorder 1, %s11
      %p109 = scmp.lt.s32.totalorder %s11, 3
      %p110 = pnand %p108, %p109
      %p111 = pneg %p110
      // Predicated region
      $region9: #{tpu_custom_call.1} parent=5 // pred_check
        _
      $region10: #{tpu_custom_call.1} parent=5 // pred_check_branch
        %113 = sbr.rel (%p110) target = $region12
      $region11: #{tpu_custom_call.1} parent=5 // pred_region
        %s114 = ssub.s32 %s11, 1
        // Predicated region
        $region13: #{tpu_custom_call.1} parent=11 // pred_check
          %p115 = pneg %p72
        $region14: #{tpu_custom_call.1} parent=11 // pred_check_branch
          %117 = sbr.rel (%p115) target = $region16
        $region15: #{tpu_custom_call.1} parent=11 // pred_region
          _
        $region16: #{tpu_custom_call.1} parent=11 // pred_fallthru
          _
      $region12: #{tpu_custom_call.1} parent=5 // pred_fallthru
        _
      %p118 = scmp.lt.s32.totalorder %s11, 2
      // Predicated region
      $region17: #{tpu_custom_call.1} parent=5 // pred_check
        %p119 = pneg %p118
      $region18: #{tpu_custom_call.1} parent=5 // pred_check_branch
        %121 = sbr.rel (%p119) target = $region20
      $region19: #{tpu_custom_call.1} parent=5 // pred_region
        // Predicated region
        $region21: #{tpu_custom_call.1} parent=19 // pred_check
          %p122 = pneg %p45
        $region22: #{tpu_custom_call.1} parent=19 // pred_check_branch
          %124 = sbr.rel (%p122) target = $region24
        $region23: #{tpu_custom_call.1} parent=19 // pred_region
          %s125 = smul.u32 2, %s19
          %p126 = scmp.lt.s32.totalorder %s18, 1
          %s127 = scalar_select %p126, %s18, 1
          %p128 = scmp.lt.s32.totalorder %s125, 1
          %s129 = scalar_select %p128, %s125, 1
          %s130 = smul.addr %s127, 8
          %s131 = sadd.s32 %s129, %s130
          %s132 = smul.addr %s131, 8
          %s133 = scalar_lea.vmem %s0, %s132
          %s134 = smul.u32 2, %s19
        $region24: #{tpu_custom_call.1} parent=19 // pred_fallthru
          _
      $region20: #{tpu_custom_call.1} parent=5 // pred_fallthru
        _
      %p135 = scmp.le.s32.totalorder 1, %s11
      %p136 = scmp.lt.s32.totalorder %s11, 3
      %p137 = pnand %p135, %p136
      %p138 = pneg %p137
      // Predicated region
      $region25: #{tpu_custom_call.1} parent=5 // pred_check
        _
      $region26: #{tpu_custom_call.1} parent=5 // pred_check_branch
        %140 = sbr.rel (%p137) target = $region28
      $region27: #{tpu_custom_call.1} parent=5 // pred_region
        %s141 = ssub.s32 %s11, 1
        %s142 = smul.u32 2, %s21
        %p143 = scmp.lt.s32.totalorder %s20, 1
        %s144 = scalar_select %p143, %s20, 1
        %p145 = scmp.lt.s32.totalorder %s142, 1
        %s146 = scalar_select %p145, %s142, 1
        %s147 = smul.addr %s144, 8
        %s148 = sadd.s32 %s146, %s147
        %s149 = smul.addr %s148, 8
        %s150 = scalar_lea.vmem %s0, %s149
        %p151 = pneg %p51
        %p152 = pneg %p48
        %p153 = pneg %p72
        %p154 = pneg %p69
        %p155 = pneg %p100
        %p156 = pneg %p97
        %s157 = sand.u32 %s87, 1
        %s158 = scalar_lea.sflag [#allocation3], %s157
        %s159 = sand.u32 %s87, 1
        %s160 = smul.addr %s159, 768
        %s161 = scalar_lea.vmem [#allocation2], %s160
        %s162 = smul.u32 2, %s21
        %p163 = scmp.lt.s32.totalorder %s20, 1
        %s164 = scalar_select %p163, %s20, 1
        %p165 = scmp.lt.s32.totalorder %s162, 1
        %s166 = scalar_select %p165, %s162, 1
        %s167 = smul.addr %s164, 8
        %s168 = sadd.s32 %s166, %s167
        %s169 = smul.addr %s168, 8
        %s170 = scalar_lea.vmem %s0, %s169
        %s171 = smul.u32 2, %s21
        %s172 = smul.u32 2, %s21
        %v173 = vld [vmem:[%s1] sm:$0xff]
        %v174 = vld [vmem:[%s1 + $0x8] sm:$0xff]
        %v175 = vld [vmem:[%s1 + $0x10] sm:$0xff]
        %v176 = vld [vmem:[%s1 + $0x18] sm:$0xff]
        %v177 = vld [vmem:[%s1 + $0x20] sm:$0xff]
        %v178 = vld [vmem:[%s1 + $0x28] sm:$0xff]
        %v179 = vld [vmem:[%s1 + $0x30] sm:$0xff]
        %v180 = vld [vmem:[%s1 + $0x38] sm:$0xff]
        %v181 = vld [vmem:[%s1 + $0x40] sm:$0xff]
        %v182 = vld [vmem:[%s1 + $0x48] sm:$0xff]
        %v183 = vld [vmem:[%s1 + $0x50] sm:$0xff]
        %v184 = vld [vmem:[%s1 + $0x58] sm:$0xff]
        %v185 = vld [vmem:[%s1 + $0x60] sm:$0xff]
        %v186 = vld [vmem:[%s1 + $0x68] sm:$0xff]
        %v187 = vld [vmem:[%s1 + $0x70] sm:$0xff]
        %v188 = vld [vmem:[%s1 + $0x78] sm:$0xff]
        %v189 = vld [vmem:[%s1 + $0x80] sm:$0xff]
        %v190 = vld [vmem:[%s1 + $0x88] sm:$0xff]
        %v191 = vld [vmem:[%s1 + $0x90] sm:$0xff]
        %v192 = vld [vmem:[%s1 + $0x98] sm:$0xff]
        %v193 = vld [vmem:[%s1 + $0xa0] sm:$0xff]
        %v194 = vld [vmem:[%s1 + $0xa8] sm:$0xff]
        %v195 = vld [vmem:[%s1 + $0xb0] sm:$0xff]
        %v196 = vld [vmem:[%s1 + $0xb8] sm:$0xff]
        %v197 = vld [vmem:[%s1 + $0xc0] sm:$0xff]
        %v198 = vld [vmem:[%s1 + $0xc8] sm:$0xff]
        %v199 = vld [vmem:[%s1 + $0xd0] sm:$0xff]
        %v200 = vld [vmem:[%s1 + $0xd8] sm:$0xff]
        %v201 = vld [vmem:[%s1 + $0xe0] sm:$0xff]
        %v202 = vld [vmem:[%s1 + $0xe8] sm:$0xff]
        %v203 = vld [vmem:[%s1 + $0xf0] sm:$0xff]
        %v204 = vld [vmem:[%s1 + $0xf8] sm:$0xff]
        %v205 = vld [vmem:[%s1 + $0x100] sm:$0xff]
        %v206 = vld [vmem:[%s1 + $0x108] sm:$0xff]
        %v207 = vld [vmem:[%s1 + $0x110] sm:$0xff]
        %v208 = vld [vmem:[%s1 + $0x118] sm:$0xff]
        %v209 = vld [vmem:[%s1 + $0x120] sm:$0xff]
        %v210 = vld [vmem:[%s1 + $0x128] sm:$0xff]
        %v211 = vld [vmem:[%s1 + $0x130] sm:$0xff]
        %v212 = vld [vmem:[%s1 + $0x138] sm:$0xff]
        %v213 = vld [vmem:[%s1 + $0x140] sm:$0xff]
        %v214 = vld [vmem:[%s1 + $0x148] sm:$0xff]
        %v215 = vld [vmem:[%s1 + $0x150] sm:$0xff]
        %v216 = vld [vmem:[%s1 + $0x158] sm:$0xff]
        %v217 = vld [vmem:[%s1 + $0x160] sm:$0xff]
        %v218 = vld [vmem:[%s1 + $0x168] sm:$0xff]
        %v219 = vld [vmem:[%s1 + $0x170] sm:$0xff]
        %v220 = vld [vmem:[%s1 + $0x178] sm:$0xff]
        %v221 = vld [vmem:[%s170] sm:$0xff]
        %v222 = vld [vmem:[%s170 + $0x8] sm:$0xff]
        %v223 = vld [vmem:[%s170 + $0x10] sm:$0xff]
        %v224 = vld [vmem:[%s170 + $0x18] sm:$0xff]
        %v225 = vld [vmem:[%s170 + $0x20] sm:$0xff]
        %v226 = vld [vmem:[%s170 + $0x28] sm:$0xff]
        %v227 = vld [vmem:[%s170 + $0x30] sm:$0xff]
        %v228 = vld [vmem:[%s170 + $0x38] sm:$0xff]
        %vm229 = vcmask 261120
        %v231 = vsel %vm229, %v173, 0
        %v234 = vsel %vm229, %v174, 0
        %v237 = vsel %vm229, %v175, 0
        %v240 = vsel %vm229, %v176, 0
        %v243 = vsel %vm229, %v177, 0
        %v246 = vsel %vm229, %v178, 0
        %v249 = vsel %vm229, %v179, 0
        %v252 = vsel %vm229, %v180, 0
        %v255 = vsel %vm229, %v181, 0
        %v258 = vsel %vm229, %v182, 0
        %v261 = vsel %vm229, %v183, 0
        %v264 = vsel %vm229, %v184, 0
        %v267 = vsel %vm229, %v185, 0
        %v270 = vsel %vm229, %v186, 0
        %v273 = vsel %vm229, %v187, 0
        %v276 = vsel %vm229, %v188, 0
        %v279 = vsel %vm229, %v189, 0
        %v282 = vsel %vm229, %v190, 0
        %v285 = vsel %vm229, %v191, 0
        %v288 = vsel %vm229, %v192, 0
        %v291 = vsel %vm229, %v193, 0
        %v294 = vsel %vm229, %v194, 0
        %v297 = vsel %vm229, %v195, 0
        %v300 = vsel %vm229, %v196, 0
        %v303 = vsel %vm229, %v197, 0
        %v306 = vsel %vm229, %v198, 0
        %v309 = vsel %vm229, %v199, 0
        %v312 = vsel %vm229, %v200, 0
        %v315 = vsel %vm229, %v201, 0
        %v318 = vsel %vm229, %v202, 0
        %v321 = vsel %vm229, %v203, 0
        %v324 = vsel %vm229, %v204, 0
        %v327 = vsel %vm229, %v205, 0
        %v330 = vsel %vm229, %v206, 0
        %v333 = vsel %vm229, %v207, 0
        %v336 = vsel %vm229, %v208, 0
        %v339 = vsel %vm229, %v209, 0
        %v342 = vsel %vm229, %v210, 0
        %v345 = vsel %vm229, %v211, 0
        %v348 = vsel %vm229, %v212, 0
        %v351 = vsel %vm229, %v213, 0
        %v354 = vsel %vm229, %v214, 0
        %v357 = vsel %vm229, %v215, 0
        %v360 = vsel %vm229, %v216, 0
        %v363 = vsel %vm229, %v217, 0
        %v366 = vsel %vm229, %v218, 0
        %v369 = vsel %vm229, %v219, 0
        %v372 = vsel %vm229, %v220, 0
        %374 = vmatprep.subr.mxu0 %v222
        %375 = vmatpush1.msra.mxu0 %v221
        %376 = vmatprep.subr.mxu0 %v224
        %377 = vmatpush1.msra.mxu0 %v223
        %378 = vmatprep.subr.mxu0 %v226
        %379 = vmatpush1.msra.mxu0 %v225
        %380 = vmatprep.subr.mxu0 %v228
        %381 = vmatpush1.msra.mxu0 %v227
        %382 = vmatprep.subr.mxu0 0.0
        %383 = vmatpush1.msra.mxu0 0.0
        %384 = vmatprep.subr.mxu0 0.0
        %385 = vmatpush1.msra.mxu0 0.0
        %386 = vmatprep.subr.mxu0 0.0
        %387 = vmatpush1.msra.mxu0 0.0
        %388 = vmatprep.subr.mxu0 0.0
        %389 = vmatpush1.msra.mxu0 0.0
        %390 = vmatprep.subr.mxu0 0.0
        %391 = vmatpush1.msra.mxu0 0.0
        %392 = vmatprep.subr.mxu0 0.0
        %393 = vmatpush1.msra.mxu0 0.0
        %394 = vmatprep.subr.mxu0 0.0
        %395 = vmatpush1.msra.mxu0 0.0
        %396 = vmatprep.subr.mxu0 0.0
        %397 = vmatpush1.msra.mxu0 0.0
        %398 = vmatprep.subr.mxu0 0.0
        %399 = vmatpush1.msra.mxu0 0.0
        %400 = vmatprep.subr.mxu0 0.0
        %401 = vmatpush1.msra.mxu0 0.0
        %402 = vmatprep.subr.mxu0 0.0
        %403 = vmatpush1.msra.mxu0 0.0
        %404 = vmatprep.subr.mxu0 0.0
        %405 = vmatpush1.msra.mxu0 0.0
        %406 = vmatprep.subr.mxu0 0.0
        %407 = vmatpush1.msra.mxu0 0.0
        %408 = vmatprep.subr.mxu0 0.0
        %409 = vmatpush1.msra.mxu0 0.0
        %410 = vmatprep.subr.mxu0 0.0
        %411 = vmatpush1.msra.mxu0 0.0
        %412 = vmatprep.subr.mxu0 0.0
        %413 = vmatpush1.msra.mxu0 0.0
        %414 = vmatprep.subr.mxu0 0.0
        %415 = vmatpush1.msra.mxu0 0.0
        %416 = vmatprep.subr.mxu0 0.0
        %417 = vmatpush1.msra.mxu0 0.0
        %418 = vmatprep.subr.mxu0 0.0
        %419 = vmatpush1.msra.mxu0 0.0
        %420 = vmatprep.subr.mxu0 0.0
        %421 = vmatpush1.msra.mxu0 0.0
        %422 = vmatprep.subr.mxu0 0.0
        %423 = vmatpush1.msra.mxu0 0.0
        %424 = vmatprep.subr.mxu0 0.0
        %425 = vmatpush1.msra.mxu0 0.0
        %426 = vmatprep.subr.mxu0 0.0
        %427 = vmatpush1.msra.mxu0 0.0
        %428 = vmatprep.subr.mxu0 0.0
        %429 = vmatpush1.msra.mxu0 0.0
        %430 = vmatprep.subr.mxu0 0.0
        %431 = vmatpush1.msra.mxu0 0.0
        %432 = vmatprep.subr.mxu0 0.0
        %433 = vmatpush1.msra.mxu0 0.0
        %434 = vmatprep.subr.mxu0 0.0
        %435 = vmatpush1.msra.mxu0 0.0
        %436 = vmatprep.subr.mxu0 0.0
        %437 = vmatpush1.msra.mxu0 0.0
        %438 = vmatprep.mubr.f32.mxu0 0.0
        %439 = vmatmul.mubr.f32.gmra.mrb[0].mxu0 %v231
        %v440 = vpop.f32.mrb[0].mxu0
        %v441 = vadd.f32 0.0, %v440
        %v442 = vpop.f32.mrb[0].mxu0
        %v443 = vadd.f32 0.0, %v442
        %444 = vmatprep.mubr.f32.mxu0 0.0
        %445 = vmatmul.mubr.f32.gmra.mrb[0].mxu0 %v234
        %v446 = vpop.f32.mrb[0].mxu0
        %v447 = vadd.f32 0.0, %v446
        %v448 = vpop.f32.mrb[0].mxu0
        %v449 = vadd.f32 0.0, %v448
        %450 = vmatprep.mubr.f32.mxu0 0.0
        %451 = vmatmul.mubr.f32.gmra.mrb[0].mxu0 %v237
        %v452 = vpop.f32.mrb[0].mxu0
        %v453 = vadd.f32 0.0, %v452
        %v454 = vpop.f32.mrb[0].mxu0
        %v455 = vadd.f32 0.0, %v454
        %456 = vmatprep.mubr.f32.mxu0 0.0
        %457 = vmatmul.mubr.f32.gmra.mrb[0].mxu0 %v240
        %v458 = vpop.f32.mrb[0].mxu0
        %v459 = vadd.f32 0.0, %v458
        %v460 = vpop.f32.mrb[0].mxu0
        %v461 = vadd.f32 0.0, %v460
        %462 = vmatprep.mubr.f32.mxu0 0.0
        %463 = vmatmul.mubr.f32.gmra.mrb[0].mxu0 %v243
        %v464 = vpop.f32.mrb[0].mxu0
        %v465 = vadd.f32 0.0, %v464
        %v466 = vpop.f32.mrb[0].mxu0
        %v467 = vadd.f32 0.0, %v466
        %468 = vmatprep.mubr.f32.mxu0 0.0
        %469 = vmatmul.mubr.f32.gmra.mrb[0].mxu0 %v246
        %v470 = vpop.f32.mrb[0].mxu0
        %v471 = vadd.f32 0.0, %v470
        %v472 = vpop.f32.mrb[0].mxu0
        %v473 = vadd.f32 0.0, %v472
        %474 = vmatprep.mubr.f32.mxu0 0.0
        %475 = vmatmul.mubr.f32.gmra.mrb[0].mxu0 %v249
        %v476 = vpop.f32.mrb[0].mxu0
        %v477 = vadd.f32 0.0, %v476
        %v478 = vpop.f32.mrb[0].mxu0
        %v479 = vadd.f32 0.0, %v478
        %480 = vmatprep.mubr.f32.mxu0 0.0
        %481 = vmatmul.mubr.f32.gmra.mrb[0].mxu0 %v252
        %v482 = vpop.f32.mrb[0].mxu0
        %v483 = vadd.f32 0.0, %v482
        %v484 = vpop.f32.mrb[0].mxu0
        %v485 = vadd.f32 0.0, %v484
        %486 = vmatprep.mubr.f32.mxu0 0.0
        %487 = vmatmul.mubr.f32.gmra.mrb[0].mxu0 %v255
        %v488 = vpop.f32.mrb[0].mxu0
        %v489 = vadd.f32 0.0, %v488
        %v490 = vpop.f32.mrb[0].mxu0
        %v491 = vadd.f32 0.0, %v490
        %492 = vmatprep.mubr.f32.mxu0 0.0
        %493 = vmatmul.mubr.f32.gmra.mrb[0].mxu0 %v258
        %v494 = vpop.f32.mrb[0].mxu0
        %v495 = vadd.f32 0.0, %v494
        %v496 = vpop.f32.mrb[0].mxu0
        %v497 = vadd.f32 0.0, %v496
        %498 = vmatprep.mubr.f32.mxu0 0.0
        %499 = vmatmul.mubr.f32.gmra.mrb[0].mxu0 %v261
        %v500 = vpop.f32.mrb[0].mxu0
        %v501 = vadd.f32 0.0, %v500
        %v502 = vpop.f32.mrb[0].mxu0
        %v503 = vadd.f32 0.0, %v502
        %504 = vmatprep.mubr.f32.mxu0 0.0
        %505 = vmatmul.mubr.f32.gmra.mrb[0].mxu0 %v264
        %v506 = vpop.f32.mrb[0].mxu0
        %v507 = vadd.f32 0.0, %v506
        %v508 = vpop.f32.mrb[0].mxu0
        %v509 = vadd.f32 0.0, %v508
        %510 = vmatprep.mubr.f32.mxu0 0.0
        %511 = vmatmul.mubr.f32.gmra.mrb[0].mxu0 %v267
        %v512 = vpop.f32.mrb[0].mxu0
        %v513 = vadd.f32 0.0, %v512
        %v514 = vpop.f32.mrb[0].mxu0
        %v515 = vadd.f32 0.0, %v514
        %516 = vmatprep.mubr.f32.mxu0 0.0
        %517 = vmatmul.mubr.f32.gmra.mrb[0].mxu0 %v270
        %v518 = vpop.f32.mrb[0].mxu0
        %v519 = vadd.f32 0.0, %v518
        %v520 = vpop.f32.mrb[0].mxu0
        %v521 = vadd.f32 0.0, %v520
        %522 = vmatprep.mubr.f32.mxu0 0.0
        %523 = vmatmul.mubr.f32.gmra.mrb[0].mxu0 %v273
        %v524 = vpop.f32.mrb[0].mxu0
        %v525 = vadd.f32 0.0, %v524
        %v526 = vpop.f32.mrb[0].mxu0
        %v527 = vadd.f32 0.0, %v526
        %528 = vmatprep.mubr.f32.mxu0 0.0
        %529 = vmatmul.mubr.f32.gmra.mrb[0].mxu0 %v276
        %v530 = vpop.f32.mrb[0].mxu0
        %v531 = vadd.f32 0.0, %v530
        %v532 = vpop.f32.mrb[0].mxu0
        %v533 = vadd.f32 0.0, %v532
        %534 = vmatprep.mubr.f32.mxu0 0.0
        %535 = vmatmul.mubr.f32.gmra.mrb[0].mxu0 %v279
        %v536 = vpop.f32.mrb[0].mxu0
        %v537 = vadd.f32 0.0, %v536
        %v538 = vpop.f32.mrb[0].mxu0
        %v539 = vadd.f32 0.0, %v538
        %540 = vmatprep.mubr.f32.mxu0 0.0
        %541 = vmatmul.mubr.f32.gmra.mrb[0].mxu0 %v282
        %v542 = vpop.f32.mrb[0].mxu0
        %v543 = vadd.f32 0.0, %v542
        %v544 = vpop.f32.mrb[0].mxu0
        %v545 = vadd.f32 0.0, %v544
        %546 = vmatprep.mubr.f32.mxu0 0.0
        %547 = vmatmul.mubr.f32.gmra.mrb[0].mxu0 %v285
        %v548 = vpop.f32.mrb[0].mxu0
        %v549 = vadd.f32 0.0, %v548
        %v550 = vpop.f32.mrb[0].mxu0
        %v551 = vadd.f32 0.0, %v550
        %552 = vmatprep.mubr.f32.mxu0 0.0
        %553 = vmatmul.mubr.f32.gmra.mrb[0].mxu0 %v288
        %v554 = vpop.f32.mrb[0].mxu0
        %v555 = vadd.f32 0.0, %v554
        %v556 = vpop.f32.mrb[0].mxu0
        %v557 = vadd.f32 0.0, %v556
        %558 = vmatprep.mubr.f32.mxu0 0.0
        %559 = vmatmul.mubr.f32.gmra.mrb[0].mxu0 %v291
        %v560 = vpop.f32.mrb[0].mxu0
        %v561 = vadd.f32 0.0, %v560
        %v562 = vpop.f32.mrb[0].mxu0
        %v563 = vadd.f32 0.0, %v562
        %564 = vmatprep.mubr.f32.mxu0 0.0
        %565 = vmatmul.mubr.f32.gmra.mrb[0].mxu0 %v294
        %v566 = vpop.f32.mrb[0].mxu0
        %v567 = vadd.f32 0.0, %v566
        %v568 = vpop.f32.mrb[0].mxu0
        %v569 = vadd.f32 0.0, %v568
        %570 = vmatprep.mubr.f32.mxu0 0.0
        %571 = vmatmul.mubr.f32.gmra.mrb[0].mxu0 %v297
        %v572 = vpop.f32.mrb[0].mxu0
        %v573 = vadd.f32 0.0, %v572
        %v574 = vpop.f32.mrb[0].mxu0
        %v575 = vadd.f32 0.0, %v574
        %576 = vmatprep.mubr.f32.mxu0 0.0
        %577 = vmatmul.mubr.f32.gmra.mrb[0].mxu0 %v300
        %v578 = vpop.f32.mrb[0].mxu0
        %v579 = vadd.f32 0.0, %v578
        %v580 = vpop.f32.mrb[0].mxu0
        %v581 = vadd.f32 0.0, %v580
        %582 = vmatprep.mubr.f32.mxu0 0.0
        %583 = vmatmul.mubr.f32.gmra.mrb[0].mxu0 %v303
        %v584 = vpop.f32.mrb[0].mxu0
        %v585 = vadd.f32 0.0, %v584
        %v586 = vpop.f32.mrb[0].mxu0
        %v587 = vadd.f32 0.0, %v586
        %588 = vmatprep.mubr.f32.mxu0 0.0
        %589 = vmatmul.mubr.f32.gmra.mrb[0].mxu0 %v306
        %v590 = vpop.f32.mrb[0].mxu0
        %v591 = vadd.f32 0.0, %v590
        %v592 = vpop.f32.mrb[0].mxu0
        %v593 = vadd.f32 0.0, %v592
        %594 = vmatprep.mubr.f32.mxu0 0.0
        %595 = vmatmul.mubr.f32.gmra.mrb[0].mxu0 %v309
        %v596 = vpop.f32.mrb[0].mxu0
        %v597 = vadd.f32 0.0, %v596
        %v598 = vpop.f32.mrb[0].mxu0
        %v599 = vadd.f32 0.0, %v598
        %600 = vmatprep.mubr.f32.mxu0 0.0
        %601 = vmatmul.mubr.f32.gmra.mrb[0].mxu0 %v312
        %v602 = vpop.f32.mrb[0].mxu0
        %v603 = vadd.f32 0.0, %v602
        %v604 = vpop.f32.mrb[0].mxu0
        %v605 = vadd.f32 0.0, %v604
        %606 = vmatprep.mubr.f32.mxu0 0.0
        %607 = vmatmul.mubr.f32.gmra.mrb[0].mxu0 %v315
        %v608 = vpop.f32.mrb[0].mxu0
        %v609 = vadd.f32 0.0, %v608
        %v610 = vpop.f32.mrb[0].mxu0
        %v611 = vadd.f32 0.0, %v610
        %612 = vmatprep.mubr.f32.mxu0 0.0
        %613 = vmatmul.mubr.f32.gmra.mrb[0].mxu0 %v318
        %v614 = vpop.f32.mrb[0].mxu0
        %v615 = vadd.f32 0.0, %v614
        %v616 = vpop.f32.mrb[0].mxu0
        %v617 = vadd.f32 0.0, %v616
        %618 = vmatprep.mubr.f32.mxu0 0.0
        %619 = vmatmul.mubr.f32.gmra.mrb[0].mxu0 %v321
        %v620 = vpop.f32.mrb[0].mxu0
        %v621 = vadd.f32 0.0, %v620
        %v622 = vpop.f32.mrb[0].mxu0
        %v623 = vadd.f32 0.0, %v622
        %624 = vmatprep.mubr.f32.mxu0 0.0
        %625 = vmatmul.mubr.f32.gmra.mrb[0].mxu0 %v324
        %v626 = vpop.f32.mrb[0].mxu0
        %v627 = vadd.f32 0.0, %v626
        %v628 = vpop.f32.mrb[0].mxu0
        %v629 = vadd.f32 0.0, %v628
        %630 = vmatprep.mubr.f32.mxu0 0.0
        %631 = vmatmul.mubr.f32.gmra.mrb[0].mxu0 %v327
        %v632 = vpop.f32.mrb[0].mxu0
        %v633 = vadd.f32 0.0, %v632
        %v634 = vpop.f32.mrb[0].mxu0
        %v635 = vadd.f32 0.0, %v634
        %636 = vmatprep.mubr.f32.mxu0 0.0
        %637 = vmatmul.mubr.f32.gmra.mrb[0].mxu0 %v330
        %v638 = vpop.f32.mrb[0].mxu0
        %v639 = vadd.f32 0.0, %v638
        %v640 = vpop.f32.mrb[0].mxu0
        %v641 = vadd.f32 0.0, %v640
        %642 = vmatprep.mubr.f32.mxu0 0.0
        %643 = vmatmul.mubr.f32.gmra.mrb[0].mxu0 %v333
        %v644 = vpop.f32.mrb[0].mxu0
        %v645 = vadd.f32 0.0, %v644
        %v646 = vpop.f32.mrb[0].mxu0
        %v647 = vadd.f32 0.0, %v646
        %648 = vmatprep.mubr.f32.mxu0 0.0
        %649 = vmatmul.mubr.f32.gmra.mrb[0].mxu0 %v336
        %v650 = vpop.f32.mrb[0].mxu0
        %v651 = vadd.f32 0.0, %v650
        %v652 = vpop.f32.mrb[0].mxu0
        %v653 = vadd.f32 0.0, %v652
        %654 = vmatprep.mubr.f32.mxu0 0.0
        %655 = vmatmul.mubr.f32.gmra.mrb[0].mxu0 %v339
        %v656 = vpop.f32.mrb[0].mxu0
        %v657 = vadd.f32 0.0, %v656
        %v658 = vpop.f32.mrb[0].mxu0
        %v659 = vadd.f32 0.0, %v658
        %660 = vmatprep.mubr.f32.mxu0 0.0
        %661 = vmatmul.mubr.f32.gmra.mrb[0].mxu0 %v342
        %v662 = vpop.f32.mrb[0].mxu0
        %v663 = vadd.f32 0.0, %v662
        %v664 = vpop.f32.mrb[0].mxu0
        %v665 = vadd.f32 0.0, %v664
        %666 = vmatprep.mubr.f32.mxu0 0.0
        %667 = vmatmul.mubr.f32.gmra.mrb[0].mxu0 %v345
        %v668 = vpop.f32.mrb[0].mxu0
        %v669 = vadd.f32 0.0, %v668
        %v670 = vpop.f32.mrb[0].mxu0
        %v671 = vadd.f32 0.0, %v670
        %672 = vmatprep.mubr.f32.mxu0 0.0
        %673 = vmatmul.mubr.f32.gmra.mrb[0].mxu0 %v348
        %v674 = vpop.f32.mrb[0].mxu0
        %v675 = vadd.f32 0.0, %v674
        %v676 = vpop.f32.mrb[0].mxu0
        %v677 = vadd.f32 0.0, %v676
        %678 = vmatprep.mubr.f32.mxu0 0.0
        %679 = vmatmul.mubr.f32.gmra.mrb[0].mxu0 %v351
        %v680 = vpop.f32.mrb[0].mxu0
        %v681 = vadd.f32 0.0, %v680
        %v682 = vpop.f32.mrb[0].mxu0
        %v683 = vadd.f32 0.0, %v682
        %684 = vmatprep.mubr.f32.mxu0 0.0
        %685 = vmatmul.mubr.f32.gmra.mrb[0].mxu0 %v354
        %v686 = vpop.f32.mrb[0].mxu0
        %v687 = vadd.f32 0.0, %v686
        %v688 = vpop.f32.mrb[0].mxu0
        %v689 = vadd.f32 0.0, %v688
        %690 = vmatprep.mubr.f32.mxu0 0.0
        %691 = vmatmul.mubr.f32.gmra.mrb[0].mxu0 %v357
        %v692 = vpop.f32.mrb[0].mxu0
        %v693 = vadd.f32 0.0, %v692
        %v694 = vpop.f32.mrb[0].mxu0
        %v695 = vadd.f32 0.0, %v694
        %696 = vmatprep.mubr.f32.mxu0 0.0
        %697 = vmatmul.mubr.f32.gmra.mrb[0].mxu0 %v360
        %v698 = vpop.f32.mrb[0].mxu0
        %v699 = vadd.f32 0.0, %v698
        %v700 = vpop.f32.mrb[0].mxu0
        %v701 = vadd.f32 0.0, %v700
        %702 = vmatprep.mubr.f32.mxu0 0.0
        %703 = vmatmul.mubr.f32.gmra.mrb[0].mxu0 %v363
        %v704 = vpop.f32.mrb[0].mxu0
        %v705 = vadd.f32 0.0, %v704
        %v706 = vpop.f32.mrb[0].mxu0
        %v707 = vadd.f32 0.0, %v706
        %708 = vmatprep.mubr.f32.mxu0 0.0
        %709 = vmatmul.mubr.f32.gmra.mrb[0].mxu0 %v366
        %v710 = vpop.f32.mrb[0].mxu0
        %v711 = vadd.f32 0.0, %v710
        %v712 = vpop.f32.mrb[0].mxu0
        %v713 = vadd.f32 0.0, %v712
        %714 = vmatprep.mubr.f32.mxu0 0.0
        %715 = vmatmul.mubr.f32.gmra.mrb[0].mxu0 %v369
        %v716 = vpop.f32.mrb[0].mxu0
        %v717 = vadd.f32 0.0, %v716
        %v718 = vpop.f32.mrb[0].mxu0
        %v719 = vadd.f32 0.0, %v718
        %720 = vmatprep.mubr.f32.mxu0 0.0
        %721 = vmatmul.mubr.f32.gmra.mrb[0].mxu0 %v372
        %v722 = vpop.f32.mrb[0].mxu0
        %v723 = vadd.f32 0.0, %v722
        %v724 = vpop.f32.mrb[0].mxu0
        %v725 = vadd.f32 0.0, %v724
        %726 = vdwg.mxu0
        %727 = vst [vmem:[%s161] sm:$0xff] %v441
        %728 = vst [vmem:[%s161 + $0x8] sm:$0xff] %v443
        %729 = vst [vmem:[%s161 + $0x10] sm:$0xff] %v447
        %730 = vst [vmem:[%s161 + $0x18] sm:$0xff] %v449
        %731 = vst [vmem:[%s161 + $0x20] sm:$0xff] %v453
        %732 = vst [vmem:[%s161 + $0x28] sm:$0xff] %v455
        %733 = vst [vmem:[%s161 + $0x30] sm:$0xff] %v459
        %734 = vst [vmem:[%s161 + $0x38] sm:$0xff] %v461
        %735 = vst [vmem:[%s161 + $0x40] sm:$0xff] %v465
        %736 = vst [vmem:[%s161 + $0x48] sm:$0xff] %v467
        %737 = vst [vmem:[%s161 + $0x50] sm:$0xff] %v471
        %738 = vst [vmem:[%s161 + $0x58] sm:$0xff] %v473
        %739 = vst [vmem:[%s161 + $0x60] sm:$0xff] %v477
        %740 = vst [vmem:[%s161 + $0x68] sm:$0xff] %v479
        %741 = vst [vmem:[%s161 + $0x70] sm:$0xff] %v483
        %742 = vst [vmem:[%s161 + $0x78] sm:$0xff] %v485
        %743 = vst [vmem:[%s161 + $0x80] sm:$0xff] %v489
        %744 = vst [vmem:[%s161 + $0x88] sm:$0xff] %v491
        %745 = vst [vmem:[%s161 + $0x90] sm:$0xff] %v495
        %746 = vst [vmem:[%s161 + $0x98] sm:$0xff] %v497
        %747 = vst [vmem:[%s161 + $0xa0] sm:$0xff] %v501
        %748 = vst [vmem:[%s161 + $0xa8] sm:$0xff] %v503
        %749 = vst [vmem:[%s161 + $0xb0] sm:$0xff] %v507
        %750 = vst [vmem:[%s161 + $0xb8] sm:$0xff] %v509
        %751 = vst [vmem:[%s161 + $0xc0] sm:$0xff] %v513
        %752 = vst [vmem:[%s161 + $0xc8] sm:$0xff] %v515
        %753 = vst [vmem:[%s161 + $0xd0] sm:$0xff] %v519
        %754 = vst [vmem:[%s161 + $0xd8] sm:$0xff] %v521
        %755 = vst [vmem:[%s161 + $0xe0] sm:$0xff] %v525
        %756 = vst [vmem:[%s161 + $0xe8] sm:$0xff] %v527
        %757 = vst [vmem:[%s161 + $0xf0] sm:$0xff] %v531
        %758 = vst [vmem:[%s161 + $0xf8] sm:$0xff] %v533
        %759 = vst [vmem:[%s161 + $0x100] sm:$0xff] %v537
        %760 = vst [vmem:[%s161 + $0x108] sm:$0xff] %v539
        %761 = vst [vmem:[%s161 + $0x110] sm:$0xff] %v543
        %762 = vst [vmem:[%s161 + $0x118] sm:$0xff] %v545
        %763 = vst [vmem:[%s161 + $0x120] sm:$0xff] %v549
        %764 = vst [vmem:[%s161 + $0x128] sm:$0xff] %v551
        %765 = vst [vmem:[%s161 + $0x130] sm:$0xff] %v555
        %766 = vst [vmem:[%s161 + $0x138] sm:$0xff] %v557
        %767 = vst [vmem:[%s161 + $0x140] sm:$0xff] %v561
        %768 = vst [vmem:[%s161 + $0x148] sm:$0xff] %v563
        %769 = vst [vmem:[%s161 + $0x150] sm:$0xff] %v567
        %770 = vst [vmem:[%s161 + $0x158] sm:$0xff] %v569
        %771 = vst [vmem:[%s161 + $0x160] sm:$0xff] %v573
        %772 = vst [vmem:[%s161 + $0x168] sm:$0xff] %v575
        %773 = vst [vmem:[%s161 + $0x170] sm:$0xff] %v579
        %774 = vst [vmem:[%s161 + $0x178] sm:$0xff] %v581
        %775 = vst [vmem:[%s161 + $0x180] sm:$0xff] %v585
        %776 = vst [vmem:[%s161 + $0x188] sm:$0xff] %v587
        %777 = vst [vmem:[%s161 + $0x190] sm:$0xff] %v591
        %778 = vst [vmem:[%s161 + $0x198] sm:$0xff] %v593
        %779 = vst [vmem:[%s161 + $0x1a0] sm:$0xff] %v597
        %780 = vst [vmem:[%s161 + $0x1a8] sm:$0xff] %v599
        %781 = vst [vmem:[%s161 + $0x1b0] sm:$0xff] %v603
        %782 = vst [vmem:[%s161 + $0x1b8] sm:$0xff] %v605
        %783 = vst [vmem:[%s161 + $0x1c0] sm:$0xff] %v609
        %784 = vst [vmem:[%s161 + $0x1c8] sm:$0xff] %v611
        %785 = vst [vmem:[%s161 + $0x1d0] sm:$0xff] %v615
        %786 = vst [vmem:[%s161 + $0x1d8] sm:$0xff] %v617
        %787 = vst [vmem:[%s161 + $0x1e0] sm:$0xff] %v621
        %788 = vst [vmem:[%s161 + $0x1e8] sm:$0xff] %v623
        %789 = vst [vmem:[%s161 + $0x1f0] sm:$0xff] %v627
        %790 = vst [vmem:[%s161 + $0x1f8] sm:$0xff] %v629
        %791 = vst [vmem:[%s161 + $0x200] sm:$0xff] %v633
        %792 = vst [vmem:[%s161 + $0x208] sm:$0xff] %v635
        %793 = vst [vmem:[%s161 + $0x210] sm:$0xff] %v639
        %794 = vst [vmem:[%s161 + $0x218] sm:$0xff] %v641
        %795 = vst [vmem:[%s161 + $0x220] sm:$0xff] %v645
        %796 = vst [vmem:[%s161 + $0x228] sm:$0xff] %v647
        %797 = vst [vmem:[%s161 + $0x230] sm:$0xff] %v651
        %798 = vst [vmem:[%s161 + $0x238] sm:$0xff] %v653
        %799 = vst [vmem:[%s161 + $0x240] sm:$0xff] %v657
        %800 = vst [vmem:[%s161 + $0x248] sm:$0xff] %v659
        %801 = vst [vmem:[%s161 + $0x250] sm:$0xff] %v663
        %802 = vst [vmem:[%s161 + $0x258] sm:$0xff] %v665
        %803 = vst [vmem:[%s161 + $0x260] sm:$0xff] %v669
        %804 = vst [vmem:[%s161 + $0x268] sm:$0xff] %v671
        %805 = vst [vmem:[%s161 + $0x270] sm:$0xff] %v675
        %806 = vst [vmem:[%s161 + $0x278] sm:$0xff] %v677
        %807 = vst [vmem:[%s161 + $0x280] sm:$0xff] %v681
        %808 = vst [vmem:[%s161 + $0x288] sm:$0xff] %v683
        %809 = vst [vmem:[%s161 + $0x290] sm:$0xff] %v687
        %810 = vst [vmem:[%s161 + $0x298] sm:$0xff] %v689
        %811 = vst [vmem:[%s161 + $0x2a0] sm:$0xff] %v693
        %812 = vst [vmem:[%s161 + $0x2a8] sm:$0xff] %v695
        %813 = vst [vmem:[%s161 + $0x2b0] sm:$0xff] %v699
        %814 = vst [vmem:[%s161 + $0x2b8] sm:$0xff] %v701
        %815 = vst [vmem:[%s161 + $0x2c0] sm:$0xff] %v705
        %816 = vst [vmem:[%s161 + $0x2c8] sm:$0xff] %v707
        %817 = vst [vmem:[%s161 + $0x2d0] sm:$0xff] %v711
        %818 = vst [vmem:[%s161 + $0x2d8] sm:$0xff] %v713
        %819 = vst [vmem:[%s161 + $0x2e0] sm:$0xff] %v717
        %820 = vst [vmem:[%s161 + $0x2e8] sm:$0xff] %v719
        %821 = vst [vmem:[%s161 + $0x2f0] sm:$0xff] %v723
        %822 = vst [vmem:[%s161 + $0x2f8] sm:$0xff] %v725
        %s823 = sand.u32 %s87, 1
        %s824 = scalar_lea.sflag [#allocation3], %s823
        %s825 = sand.u32 %s87, 1
        %s826 = smul.addr %s825, 768
        %s827 = scalar_lea.vmem [#allocation2], %s826
        // Predicated region
        $region29: #{tpu_custom_call.1} parent=27 // pred_check
          %p828 = pneg %p97
        $region30: #{tpu_custom_call.1} parent=27 // pred_check_branch
          %830 = sbr.rel (%p828) target = $region32
        $region31: #{tpu_custom_call.1} parent=27 // pred_region
          %s831 = smul.u32 2, %s21
          %s833 = ssub.s32 12288, 12288
          %834 = vsyncadd %s824, %s833
          %s835 = smul.addr %s20, 96
          %s836 = sadd.s32 %s831, %s835
          %s837 = smul.addr %s836, 128
          %s838 = scalar_lea.hbm %s2, %s837
          %s839 = sshll.u32 %s827, 4
          %s840 = int_to_ptr.vmem [resolvable:$true] %s839
          %845 = dma.vmem_to_hbm [thread:$0]  %s840, 12288, %s838, %s824, 256, 256, 16
        $region32: #{tpu_custom_call.1} parent=27 // pred_fallthru
          _
      $region28: #{tpu_custom_call.1} parent=5 // pred_fallthru
        _
      %p846 = scmp.le.s32.totalorder 2, %s11
      // Predicated region
      $region33: #{tpu_custom_call.1} parent=5 // pred_check
        %p847 = pneg %p846
      $region34: #{tpu_custom_call.1} parent=5 // pred_check_branch
        %849 = sbr.rel (%p847) target = $region36
      $region35: #{tpu_custom_call.1} parent=5 // pred_region
        %s850 = ssub.s32 %s11, 2
        // Predicated region
        $region37: #{tpu_custom_call.1} parent=35 // pred_check
          %p851 = pneg %p103
        $region38: #{tpu_custom_call.1} parent=35 // pred_check_branch
          %853 = sbr.rel (%p851) target = $region40
        $region39: #{tpu_custom_call.1} parent=35 // pred_region
          %s854 = sand.u32 %s88, 1
          %s855 = scalar_lea.sflag [#allocation3], %s854
          %s856 = sand.u32 %s88, 1
          %s857 = smul.addr %s856, 768
          %s858 = scalar_lea.vmem [#allocation2], %s857
          %859 = dma.done %s855, 12288
        $region40: #{tpu_custom_call.1} parent=35 // pred_fallthru
          _
      $region36: #{tpu_custom_call.1} parent=5 // pred_fallthru
        _
    $region6: #{tpu_custom_call.1} parent=1 // loop_footer
      %s15 = sadd.s32 1, %s11
    $region7: #{tpu_custom_call.1} parent=1 // loop_footer_branch
      %10 = sbr.rel target = $region3
    $region8: #{tpu_custom_call.1} parent=1 // loop_exit
      _
    %860 = vsyncpa [#allocation3], 1
    %s861 = scalar_lea.sflag [#allocation3], 1
    %862 = vsyncpa %s861, 1

</llo_original>
